<compile_context>
chip_gen: v7x
topology: tpu7x:2x2x1
jax: 0.10.0
libtpu: 0.0.40
codegen_flags: <defaults>
</compile_context>

<pallas_src>
import jax
import jax.numpy as jnp
from jax.experimental import pallas as pl
from jax.experimental.pallas import tpu as pltpu

LANE = 128
MAX_BLOCK_BYTES = 4 * 1024 * 1024  # per input, per pipeline buffer


def _make_mse_kernel(tiles_per_split, rows_per_tile, total_rows, num_tiles,
                     acc_rows, need_mask):
    """Kernel accumulating sum((x-y)^2) of one split directly into out_ref."""

    def kernel(x_ref, y_ref, out_ref):
        s = pl.program_id(0)
        t = pl.program_id(1)
        g = s * tiles_per_split + t  # global tile index (may exceed num_tiles-1)

        @pl.when(t == 0)
        def _init():
            out_ref[...] = jnp.zeros_like(out_ref)

        x = x_ref[...].astype(jnp.float32)
        y = y_ref[...].astype(jnp.float32)
        d = x - y
        sq = d * d

        def accumulate(vals):
            # (rows_per_tile, 128) -> (rows_per_tile//acc_rows, acc_rows, 128);
            # leading-axis sum = independent VPU add chains into acc_rows//8
            # accumulator vregs (all 4 VALU slots can issue).
            out_ref[...] += vals.reshape(-1, acc_rows, LANE).sum(axis=0)

        if need_mask:
            last = num_tiles - 1

            @pl.when(g < last)
            def _full():  # mask-free fast path for all full tiles
                accumulate(sq)

            @pl.when(g == last)
            def _ragged():  # only the final real tile pays the row mask
                row0 = last * rows_per_tile
                row_ids = jax.lax.broadcasted_iota(jnp.int32, sq.shape, 0) + row0
                # select (not multiply) so NaN/Inf garbage in the padded rows
                # cannot propagate.
                accumulate(jnp.where(row_ids < total_rows, sq, 0.0))
        else:
            @pl.when(g < num_tiles)
            def _full():  # skips the phantom trailing tile of an odd split
                accumulate(sq)

    return kernel


def reconstruction_loss(x, y, *, max_block_bytes=MAX_BLOCK_BYTES):
    """MSE loss (mean of squared differences), matching nn.MSELoss()."""
    assert x.shape == y.shape
    n_elems = x.size

    if n_elems == 0:
        # nn.MSELoss on empty input yields NaN.
        return jnp.float32(float("nan"))

    inv_n = 1.0 / float(n_elems)  # double-precision, folded at trace time

    xf = x.reshape(-1)
    yf = y.reshape(-1)

    rows = n_elems // LANE          # number of full 128-lane rows
    rem = n_elems - rows * LANE     # sub-row tail, handled in plain JAX

    if rows < 8:
        # Tiny input: not worth a kernel launch.
        d = xf.astype(jnp.float32) - yf.astype(jnp.float32)
        return jnp.sum(d * d) * jnp.float32(inv_n)

    itemsize = max(x.dtype.itemsize, y.dtype.itemsize)
    max_rows = max(8, (max_block_bytes // (LANE * itemsize)) // 8 * 8)
    rows_per_tile = min(max_rows, (rows // 8) * 8)
    num_tiles = (rows + rows_per_tile - 1) // rows_per_tile
    need_mask = (rows % rows_per_tile) != 0

    # Always split the reduction 2-way when there is more than one tile
    # (v7x: one half per TensorCore); odd counts get a phantom trailing tile
    # that is skipped in-kernel.
    n_split = 2 if num_tiles >= 2 else 1
    tiles_per_split = (num_tiles + n_split - 1) // n_split

    # Widest accumulator (in sublanes) that divides the tile row count.
    if rows_per_tile % 32 == 0:
        acc_rows = 32
    elif rows_per_tile % 16 == 0:
        acc_rows = 16
    else:
        acc_rows = 8

    # Lane-dense (rows, 128) slab.  For 128-multiple inputs this is a pure
    # bitcast reshape (no copy); for ragged inputs the prefix slice may
    # materialize a copy (see TODO at top of file).
    x2d = xf[: rows * LANE].reshape(rows, LANE)
    y2d = yf[: rows * LANE].reshape(rows, LANE)

    kernel = _make_mse_kernel(tiles_per_split, rows_per_tile, rows, num_tiles,
                              acc_rows, need_mask)

    def in_index_map(s, t):
        # Clamp so the phantom trailing tile of an odd split never DMAs
        # out-of-bounds HBM (its contribution is skipped in-kernel anyway).
        return (jnp.minimum(s * tiles_per_split + t, num_tiles - 1), 0)

    cost = pl.CostEstimate(
        flops=3 * rows * LANE,
        transcendentals=0,
        bytes_accessed=rows * LANE * (x2d.dtype.itemsize + y2d.dtype.itemsize)
        + n_split * acc_rows * LANE * 4,
    )

    partials = pl.pallas_call(
        kernel,
        out_shape=jax.ShapeDtypeStruct((n_split * acc_rows, LANE), jnp.float32),
        grid_spec=pltpu.PrefetchScalarGridSpec(
            num_scalar_prefetch=0,
            grid=(n_split, tiles_per_split),
            in_specs=[
                pl.BlockSpec((rows_per_tile, LANE), in_index_map),
                pl.BlockSpec((rows_per_tile, LANE), in_index_map),
            ],
            # Same block across the reduction axis -> resident accumulator.
            out_specs=pl.BlockSpec((acc_rows, LANE), lambda s, t: (s, 0)),
        ),
        compiler_params=pltpu.CompilerParams(
            dimension_semantics=("parallel", "arbitrary"),
            vmem_limit_bytes=32 * 1024 * 1024,
        ),
        cost_estimate=cost,
    )(x2d, y2d)

    total = jnp.sum(partials, dtype=jnp.float32)

    if rem:
        # Sub-row tail (< 128 elements): negligible, do it in plain JAX.
        xt = xf[rows * LANE:].astype(jnp.float32)
        yt = yf[rows * LANE:].astype(jnp.float32)
        dt = xt - yt
        total = total + jnp.sum(dt * dt)

    return total * jnp.float32(inv_n)


# TODO(synk): the VGG-16 perceptual network and L1_Charbonnier_loss are
# constructed in the PyTorch module but never used in forward(), so they are
# intentionally not implemented here.


if __name__ == "__main__":
    ok = True

    # Case 1: lane-aligned NCHW input (single tile, no mask, no split).
    kx, ky = jax.random.split(jax.random.PRNGKey(0))
    X = jax.random.normal(kx, (2, 4, 16, 16), dtype=jnp.float32)
    Y = jax.random.normal(ky, (2, 4, 16, 16), dtype=jnp.float32)
    loss = reconstruction_loss(X, Y)
    jax.block_until_ready(loss)
    ref = jnp.mean((X - Y) ** 2)
    ok &= bool(jnp.allclose(loss, ref, rtol=1e-5, atol=1e-6))

    # Case 2: non-128-multiple element count -> ragged last tile (row mask),
    # 2-way split, and the JAX sub-row tail path.
    kx2, ky2 = jax.random.split(jax.random.PRNGKey(1))
    X2 = jax.random.normal(kx2, (3, 5, 17, 19), dtype=jnp.float32)
    Y2 = jax.random.normal(ky2, (3, 5, 17, 19), dtype=jnp.float32)
    loss2 = reconstruction_loss(X2, Y2)
    jax.block_until_ready(loss2)
    ref2 = jnp.mean((X2 - Y2) ** 2)
    ok &= bool(jnp.allclose(loss2, ref2, rtol=1e-5, atol=1e-6))

    # Case 3: small max_block_bytes forces an odd tile count -> exercises the
    # always-on 2-way split with a phantom (skipped) trailing tile + row mask.
    kx3, ky3 = jax.random.split(jax.random.PRNGKey(2))
    X3 = jax.random.normal(kx3, (2, 4, 16, 40), dtype=jnp.float32)
    Y3 = jax.random.normal(ky3, (2, 4, 16, 40), dtype=jnp.float32)
    loss3 = reconstruction_loss(X3, Y3, max_block_bytes=16 * LANE * 4)
    jax.block_until_ready(loss3)
    ref3 = jnp.mean((X3 - Y3) ** 2)
    ok &= bool(jnp.allclose(loss3, ref3, rtol=1e-5, atol=1e-6))

    assert ok, (loss, ref, loss2, ref2, loss3, ref3)
    print("KERNEL_OK")
</pallas_src>

<mosaic_0001>
module attributes {stable_mosaic.version = 11 : i64} {
  func.func @kernel(%arg0: i32, %arg1: i32, %arg2: memref<16x128xf32, #tpu.memory_space<vmem>>, %arg3: memref<16x128xf32, #tpu.memory_space<vmem>>, %arg4: memref<16x128xf32, #tpu.memory_space<vmem>>) attributes {dimension_semantics = [#tpu.dimension_semantics<parallel>, #tpu.dimension_semantics<arbitrary>], iteration_bounds = array<i64: 1, 1>, scalar_prefetch = 0 : i64, scratch_operands = 0 : i64, tpu.core_type = #tpu.core_type<tc>, window_params = [{transform_indices = @transform_0, window_bounds = array<i64: 16, 128>}, {transform_indices = @transform_1, window_bounds = array<i64: 16, 128>}, {transform_indices = @transform_2, window_bounds = array<i64: 16, 128>}]} {
    %c1_i32 = arith.constant 1 : i32
    %0 = arith.muli %arg0, %c1_i32 : i32
    %1 = arith.addi %0, %arg1 : i32
    %c0_i32 = arith.constant 0 : i32
    %2 = arith.cmpi eq, %arg1, %c0_i32 : i32
    %3 = arith.extui %2 : i1 to i32
    %c0_i32_0 = arith.constant 0 : i32
    %4 = arith.cmpi ne, %3, %c0_i32_0 : i32
    scf.if %4 {
      %cst = arith.constant 0.000000e+00 : f32
      %12 = vector.broadcast %cst : f32 to vector<16x128xf32>
      %c0_6 = arith.constant 0 : index
      %c0_7 = arith.constant 0 : index
      %13 = vector.load %arg4[%c0_6, %c0_7] : memref<16x128xf32, #tpu.memory_space<vmem>>, vector<16x128xf32>
      tpu.vector_store %arg4[%c0_6, %c0_7], %12 {strides = array<i32>} : memref<16x128xf32, #tpu.memory_space<vmem>>, vector<16x128xf32>,
    } else {
    }
    %c0 = arith.constant 0 : index
    %c0_1 = arith.constant 0 : index
    %5 = vector.load %arg2[%c0, %c0_1] : memref<16x128xf32, #tpu.memory_space<vmem>>, vector<16x128xf32>
    %c0_2 = arith.constant 0 : index
    %c0_3 = arith.constant 0 : index
    %6 = vector.load %arg3[%c0_2, %c0_3] : memref<16x128xf32, #tpu.memory_space<vmem>>, vector<16x128xf32>
    %7 = arith.subf %5, %6 : vector<16x128xf32>
    %8 = arith.mulf %7, %7 : vector<16x128xf32>
    %c1_i32_4 = arith.constant 1 : i32
    %9 = arith.cmpi slt, %1, %c1_i32_4 : i32
    %10 = arith.extui %9 : i1 to i32
    %c0_i32_5 = arith.constant 0 : i32
    %11 = arith.cmpi ne, %10, %c0_i32_5 : i32
    scf.if %11 {
      %c0_6 = arith.constant 0 : index
      %c0_7 = arith.constant 0 : index
      %12 = vector.load %arg4[%c0_6, %c0_7] : memref<16x128xf32, #tpu.memory_space<vmem>>, vector<16x128xf32>
      %13 = vector.shape_cast %8 : vector<16x128xf32> to vector<1x16x128xf32>
      %cst = arith.constant dense<0.000000e+00> : vector<16x128xf32>
      %14 = vector.multi_reduction <add>, %13, %cst [0] : vector<1x16x128xf32> to vector<16x128xf32>
      %15 = arith.addf %12, %14 : vector<16x128xf32>
      %c0_8 = arith.constant 0 : index
      %c0_9 = arith.constant 0 : index
      %16 = vector.load %arg4[%c0_8, %c0_9] : memref<16x128xf32, #tpu.memory_space<vmem>>, vector<16x128xf32>
      tpu.vector_store %arg4[%c0_8, %c0_9], %15 {strides = array<i32>} : memref<16x128xf32, #tpu.memory_space<vmem>>, vector<16x128xf32>,
    } else {
    }
    return
  }
  func.func @transform_0(%arg0: i32, %arg1: i32) -> (i32, i32) {
    %c1_i32 = arith.constant 1 : i32
    %0 = arith.muli %arg0, %c1_i32 : i32
    %1 = arith.addi %0, %arg1 : i32
    %c0_i32 = arith.constant 0 : i32
    %2 = arith.minsi %1, %c0_i32 : i32
    %c0_i32_0 = arith.constant 0 : i32
    %c0_i32_1 = arith.constant 0 : i32
    return %2, %c0_i32_0 : i32, i32
  }
  func.func @transform_1(%arg0: i32, %arg1: i32) -> (i32, i32) {
    %c1_i32 = arith.constant 1 : i32
    %0 = arith.muli %arg0, %c1_i32 : i32
    %1 = arith.addi %0, %arg1 : i32
    %c0_i32 = arith.constant 0 : i32
    %2 = arith.minsi %1, %c0_i32 : i32
    %c0_i32_0 = arith.constant 0 : i32
    %c0_i32_1 = arith.constant 0 : i32
    return %2, %c0_i32_0 : i32, i32
  }
  func.func @transform_2(%arg0: i32, %arg1: i32) -> (i32, i32) {
    %c0_i32 = arith.constant 0 : i32
    %c0_i32_0 = arith.constant 0 : i32
    return %arg0, %c0_i32 : i32, i32
  }
}

</mosaic_0001>

<llo_original>
// kernel: tpu_custom_call.1
$region0: #{tpu_custom_call.1}
  #allocation0 [shape = 'u32[]', space=smem, size = 0x4, offset = 0x4, fixed_abs, tag = 'smem constant byte address 0x4 - core index']
  #allocation1 [shape = 'u32[144,128]{1,0:T(1,128)}', space=vmem, size = 0x12000, scoped, tag = 'internal scratch']
  %s0 = inlined_call_operand.hbm [shape: f32[16,128], index: 0, kind: input, shape index: {}]
  %s1 = inlined_call_operand.hbm [shape: f32[16,128], index: 1, kind: input, shape index: {}]
  %s2 = inlined_call_operand.hbm [shape: f32[16,128], index: 2, kind: output, shape index: {}]
  %s3 = sld [smem:[#allocation0]]
  $region34: #{tpu_custom_call.1} parent=0
    _
  %s5 = ssub.s32 1, %s3
  %s6 = scalar_select 0, %s5, %s3
  $region1: #{tpu_custom_call.1} parent=0
    #allocation2 [shape = 'u8[8192]{0}', space=vmem, size = 0x2000, scoped, tag = 'input window, operand 0, single buffered']
    #allocation3 [shape = 's32[1]{0}', space=sflag, size = 0x4, scoped, tag = 'scoped memory for tpu_custom_call.1']
    #allocation4 [shape = 's32[1]{0}', space=sflag, size = 0x4, scoped, tag = 'scoped memory for tpu_custom_call.1']
    #allocation5 [shape = 'u8[8192]{0}', space=vmem, size = 0x2000, scoped, tag = 'input window, operand 1, single buffered']
    #allocation6 [shape = 's32[1]{0}', space=sflag, size = 0x4, scoped, tag = 'scoped memory for tpu_custom_call.1']
    #allocation7 [shape = 'u8[8192]{0}', space=vmem, size = 0x2000, scoped, tag = 'output window, operand 0, single buffered']
    %7 = vsyncpa [#allocation3], 0
    %8 = vsyncpa [#allocation6], 0
    %9 = vsyncpa [#allocation4], 0
    // Predicated region
    $region2: #{tpu_custom_call.1} parent=1 // pred_check
      _
    $region3: #{tpu_custom_call.1} parent=1 // pred_check_branch
      %11 = sbr.rel (0) target = $region5
    $region4: #{tpu_custom_call.1} parent=1 // pred_region
      %s12 = sadd.s32 0, 0
      %p13 = scmp.lt.s32.totalorder %s12, 0
      %s14 = scalar_select %p13, %s12, 0
      %s15 = smul.u32 2, %s14
      %s17 = ssub.s32 256, 256
      %18 = vsyncadd [#allocation3], %s17
      %s19 = smul.addr %s15, 128
      %s20 = scalar_lea.hbm %s0, %s19
      %s21 = sshll.u32 [#allocation2], 4
      %s22 = int_to_ptr.vmem [resolvable:$true] %s21
      %27 = dma.hbm_to_vmem [thread:$0]  %s20, 256, %s22, [#allocation3], 128, 128, 8
    $region5: #{tpu_custom_call.1} parent=1 // pred_fallthru
      _
    // Predicated region
    $region6: #{tpu_custom_call.1} parent=1 // pred_check
      _
    $region7: #{tpu_custom_call.1} parent=1 // pred_check_branch
      %29 = sbr.rel (0) target = $region9
    $region8: #{tpu_custom_call.1} parent=1 // pred_region
      %s30 = sadd.s32 0, 0
      %p31 = scmp.lt.s32.totalorder %s30, 0
      %s32 = scalar_select %p31, %s30, 0
      %s33 = smul.u32 2, %s32
      %s35 = ssub.s32 256, 256
      %36 = vsyncadd [#allocation6], %s35
      %s37 = smul.addr %s33, 128
      %s38 = scalar_lea.hbm %s1, %s37
      %s39 = sshll.u32 [#allocation5], 4
      %s40 = int_to_ptr.vmem [resolvable:$true] %s39
      %45 = dma.hbm_to_vmem [thread:$0]  %s38, 256, %s40, [#allocation6], 128, 128, 8
    $region9: #{tpu_custom_call.1} parent=1 // pred_fallthru
      _
    // Predicated region
    $region10: #{tpu_custom_call.1} parent=1 // pred_check
      _
    $region11: #{tpu_custom_call.1} parent=1 // pred_check_branch
      %47 = sbr.rel (0) target = $region13
    $region12: #{tpu_custom_call.1} parent=1 // pred_region
      %48 = dma.done [#allocation3], 256
    $region13: #{tpu_custom_call.1} parent=1 // pred_fallthru
      _
    // Predicated region
    $region14: #{tpu_custom_call.1} parent=1 // pred_check
      _
    $region15: #{tpu_custom_call.1} parent=1 // pred_check_branch
      %50 = sbr.rel (0) target = $region17
    $region16: #{tpu_custom_call.1} parent=1 // pred_region
      %51 = dma.done [#allocation6], 256
    $region17: #{tpu_custom_call.1} parent=1 // pred_fallthru
      _
    %s52 = sadd.s32 0, 0
    %p53 = scmp.lt.s32.totalorder %s52, 0
    %s54 = scalar_select %p53, %s52, 0
    %s55 = smul.u32 2, %s54
    %s56 = sadd.s32 0, 0
    %p57 = scmp.lt.s32.totalorder %s56, 0
    %s58 = scalar_select %p57, %s56, 0
    %s59 = smul.u32 2, %s58
    %s60 = sadd.s32 0, 0
    %p61 = scmp.eq.s32.totalorder 0, 0
    // Predicated region
    $region18: #{tpu_custom_call.1} parent=1 // pred_check
      %p62 = pneg %p61
    $region19: #{tpu_custom_call.1} parent=1 // pred_check_branch
      %64 = sbr.rel (%p62) target = $region21
    $region20: #{tpu_custom_call.1} parent=1 // pred_region
      %65 = vst [vmem:[#allocation7] sm:$0xff] 0.0
      %66 = vst [vmem:[#allocation7 + $0x8] sm:$0xff] 0.0
    $region21: #{tpu_custom_call.1} parent=1 // pred_fallthru
      _
    %v67 = vld [vmem:[#allocation2] sm:$0xff]
    %v68 = vld [vmem:[#allocation2 + $0x8] sm:$0xff]
    %v69 = vld [vmem:[#allocation5] sm:$0xff]
    %v70 = vld [vmem:[#allocation5 + $0x8] sm:$0xff]
    %v71 = vsub.f32 %v67, %v69
    %v72 = vsub.f32 %v68, %v70
    %v73 = vmul.f32 %v71, %v71
    %v74 = vmul.f32 %v72, %v72
    %p75 = scmp.lt.s32.totalorder %s60, 1
    // Predicated region
    $region22: #{tpu_custom_call.1} parent=1 // pred_check
      %p76 = pneg %p75
    $region23: #{tpu_custom_call.1} parent=1 // pred_check_branch
      %78 = sbr.rel (%p76) target = $region25
    $region24: #{tpu_custom_call.1} parent=1 // pred_region
      %v79 = vld [vmem:[#allocation7] sm:$0xff]
      %v80 = vld [vmem:[#allocation7 + $0x8] sm:$0xff]
      %v81 = vadd.f32 %v73, 0.0
      %v82 = vadd.f32 %v74, 0.0
      %v83 = vadd.f32 %v79, %v81
      %v84 = vadd.f32 %v80, %v82
      %85 = vst [vmem:[#allocation7] sm:$0xff] %v83
      %86 = vst [vmem:[#allocation7 + $0x8] sm:$0xff] %v84
    $region25: #{tpu_custom_call.1} parent=1 // pred_fallthru
      _
    // Predicated region
    $region26: #{tpu_custom_call.1} parent=1 // pred_check
      _
    $region27: #{tpu_custom_call.1} parent=1 // pred_check_branch
      %88 = sbr.rel (0) target = $region29
    $region28: #{tpu_custom_call.1} parent=1 // pred_region
      %s90 = ssub.s32 256, 256
      %91 = vsyncadd [#allocation4], %s90
      %s92 = sshll.u32 [#allocation7], 4
      %s93 = int_to_ptr.vmem [resolvable:$true] %s92
      %98 = dma.vmem_to_hbm [thread:$0]  %s93, 256, %s2, [#allocation4], 128, 128, 8
    $region29: #{tpu_custom_call.1} parent=1 // pred_fallthru
      _
    // Predicated region
    $region30: #{tpu_custom_call.1} parent=1 // pred_check
      _
    $region31: #{tpu_custom_call.1} parent=1 // pred_check_branch
      %100 = sbr.rel (0) target = $region33
    $region32: #{tpu_custom_call.1} parent=1 // pred_region
      %101 = dma.done [#allocation4], 256
    $region33: #{tpu_custom_call.1} parent=1 // pred_fallthru
      _
    %102 = vsyncpa [#allocation3], 1
    %103 = vsyncpa [#allocation6], 1
    %104 = vsyncpa [#allocation4], 1

</llo_original>
